<compile_context>
chip_gen: v6e
topology: v6e:2x2x1
jax: 0.10.0
libtpu: 0.0.40
codegen_flags: <defaults>
</compile_context>

<pallas_src>
import math

import jax
import jax.numpy as jnp
from jax.experimental import pallas as pl
from jax.experimental.pallas import tpu as pltpu

LANE = 128  # lane width; output feature dim is padded to a multiple of this


def _round_up(x, m):
    return ((x + m - 1) // m) * m


def _affine_kernel(x_ref, w_ref, b_ref, o_ref):
    """Single fused affine map: o = x @ W_total + b_total.

    x_ref: (tile_b, in_f) f32   -- cast to bf16 in VMEM (MXU fast path)
    w_ref: (in_f, p_out)  bf16  -- resident (constant index_map)
    b_ref: (1, p_out)     f32   -- resident (constant index_map)
    o_ref: (tile_b, p_out) f32  -- lane-dense (p_out multiple of 128) store
    """
    h = x_ref[...].astype(jnp.bfloat16)
    acc = jnp.dot(h, w_ref[...], preferred_element_type=jnp.float32) + b_ref[...]
    o_ref[...] = acc.astype(o_ref.dtype)


def compose_affine(params):
    """Fold the activation-free Linear chain into one affine map, in f32.

    params: list of (w (in_f, out_f), b (out_f,)) with y = x @ w + b.
    Returns (W_total (in0, outL), b_total (1, outL)).
    """
    w_tot, b0 = params[0]
    b_tot = b0.reshape(1, -1)
    for w, b in params[1:]:
        w_tot = w_tot @ w
        b_tot = b_tot @ w + b.reshape(1, -1)
    return w_tot, b_tot


def pad_composed(w_tot, b_tot):
    """One-time host-side padding of the composed map: lanes -> multiple of 128."""
    in_f, out_f = w_tot.shape
    p_out = _round_up(out_f, LANE)
    w_p = jnp.zeros((in_f, p_out), jnp.bfloat16).at[:, :out_f].set(
        w_tot.astype(jnp.bfloat16)
    )
    b_p = jnp.zeros((1, p_out), jnp.float32).at[:, :out_f].set(
        b_tot.astype(jnp.float32)
    )
    return w_p, b_p


def lae_forward(x, w_p, b_p, out_dim):
    """x: (B, in_f) f32. w_p: (in_f, p_out) bf16, b_p: (1, p_out) f32.
    Returns (B, out_dim) f32 -- identical semantics to LAE.forward."""
    B, in_f = x.shape
    p_out = w_p.shape[1]

    # Batch tiling: multiples of 16 rows (full bf16 vreg sublane packing),
    # cap 1024 rows/tile, and >= 2 grid steps once B_pad >= 32 so the
    # "parallel" batch axis can be split across v7x's two TensorCores.
    B_pad = _round_up(max(B, 1), 16)
    if B_pad >= 32:
        tile_b = min(1024, _round_up(-(-B_pad // 2), 16))
    else:
        tile_b = B_pad
    B_pad = _round_up(B_pad, tile_b)

    # Only pad batch rows when needed (no full lane-pad/cast materialization
    # in HBM; the bf16 cast happens inside the kernel).
    if B_pad != B:
        x_in = jnp.zeros((B_pad, in_f), x.dtype).at[:B].set(x)
    else:
        x_in = x

    out_pad = pl.pallas_call(
        _affine_kernel,
        out_shape=jax.ShapeDtypeStruct((B_pad, p_out), jnp.float32),
        grid_spec=pltpu.PrefetchScalarGridSpec(
            num_scalar_prefetch=0,
            grid=(B_pad // tile_b,),
            in_specs=[
                pl.BlockSpec((tile_b, in_f), lambda i: (i, 0)),  # x: blocked batch
                pl.BlockSpec((in_f, p_out), lambda i: (0, 0)),   # composed W resident
                pl.BlockSpec((1, p_out), lambda i: (0, 0)),      # composed b resident
            ],
            out_specs=pl.BlockSpec((tile_b, p_out), lambda i: (i, 0)),
        ),
        compiler_params=pltpu.CompilerParams(
            dimension_semantics=("parallel",),  # batch axis -> megacore on v7x
        ),
    )(x_in, w_p, b_p)

    # Padded batch rows / padded lanes are sliced off here (required invariant:
    # padded rows pick up the bias, they are never semantically valid).
    return out_pad[:B, :out_dim]


def init_lae_params(key, input_dimension, layerinfo):
    """Unpadded f32 params mimicking nn.Linear default init (uniform +/- 1/sqrt(fan_in)).
    Weight stored as (in_f, out_f) == PyTorch weight.T so y = x @ W + b."""
    sizes = [input_dimension] + list(layerinfo)
    enc_pairs = list(zip(sizes, sizes[1:]))
    rev = sizes[::-1]
    dec_pairs = list(zip(rev, rev[1:]))
    params = []
    for in_f, out_f in enc_pairs + dec_pairs:
        key, kw, kb = jax.random.split(key, 3)
        bound = 1.0 / math.sqrt(in_f)
        w = jax.random.uniform(kw, (in_f, out_f), jnp.float32, -bound, bound)
        b = jax.random.uniform(kb, (out_f,), jnp.float32, -bound, bound)
        params.append((w, b))
    return params


def lae_forward_ref(x, params):
    h = x
    for w, b in params:
        h = h @ w + b
    return h


if __name__ == "__main__":
    key = jax.random.PRNGKey(0)
    key, kx = jax.random.split(key)

    batch = 8
    input_dimension = 32
    layerinfo = [16, 8]  # encoder: 32 -> 16 -> 8, decoder: 8 -> 16 -> 32

    params = init_lae_params(key, input_dimension, layerinfo)
    # Compose the full encoder+decoder chain into one affine map in f32, then pad.
    w_tot, b_tot = compose_affine(params)
    w_p, b_p = pad_composed(w_tot, b_tot)

    x = jax.random.normal(kx, (batch, input_dimension), jnp.float32)

    fwd = jax.jit(lambda xx: lae_forward(xx, w_p, b_p, input_dimension))
    out = jax.block_until_ready(fwd(x))

    ref = lae_forward_ref(x, params)  # pure f32 reference (PyTorch semantics)
    assert out.shape == (batch, input_dimension), out.shape
    # Single bf16 matmul with f32-composed weights and f32 accumulation.
    assert jnp.allclose(out, ref, atol=5e-2, rtol=5e-2), "mismatch vs reference"

    print("KERNEL_OK")
</pallas_src>

<mosaic_0001>
module attributes {stable_mosaic.version = 11 : i64} {
  func.func @_affine_kernel(%arg0: i32, %arg1: memref<16x32xf32, #tpu.memory_space<vmem>>, %arg2: memref<32x128xbf16, #tpu.memory_space<vmem>>, %arg3: memref<1x128xf32, #tpu.memory_space<vmem>>, %arg4: memref<16x128xf32, #tpu.memory_space<vmem>>) attributes {dimension_semantics = [#tpu.dimension_semantics<parallel>], iteration_bounds = array<i64: 1>, scalar_prefetch = 0 : i64, scratch_operands = 0 : i64, tpu.core_type = #tpu.core_type<tc>, window_params = [{transform_indices = @transform_0, window_bounds = array<i64: 16, 32>}, {pipeline_mode = #tpu.pipeline_mode<synchronous>, transform_indices = @transform_1, window_bounds = array<i64: 32, 128>}, {pipeline_mode = #tpu.pipeline_mode<synchronous>, transform_indices = @transform_2, window_bounds = array<i64: 1, 128>}, {transform_indices = @transform_3, window_bounds = array<i64: 16, 128>}]} {
    %c0 = arith.constant 0 : index
    %c0_0 = arith.constant 0 : index
    %0 = vector.load %arg1[%c0, %c0_0] : memref<16x32xf32, #tpu.memory_space<vmem>>, vector<16x32xf32>
    %1 = arith.truncf %0 : vector<16x32xf32> to vector<16x32xbf16>
    %c0_1 = arith.constant 0 : index
    %c0_2 = arith.constant 0 : index
    %2 = vector.load %arg2[%c0_1, %c0_2] : memref<32x128xbf16, #tpu.memory_space<vmem>>, vector<32x128xbf16>
    %cst = arith.constant dense<0.000000e+00> : vector<16x128xf32>
    %3 = tpu.matmul %1, %2, %cst {dimension_numbers = #tpu.dot_dimension_numbers<[1], [0], [0], [1], [0, 0, 1, 1], [], []>} : vector<16x32xbf16>, vector<32x128xbf16>, vector<16x128xf32> -> vector<16x128xf32>
    %c0_3 = arith.constant 0 : index
    %c0_4 = arith.constant 0 : index
    %4 = vector.load %arg3[%c0_3, %c0_4] : memref<1x128xf32, #tpu.memory_space<vmem>>, vector<1x128xf32>
    %5 = vector.broadcast %4 : vector<1x128xf32> to vector<16x128xf32>
    %6 = arith.addf %3, %5 : vector<16x128xf32>
    %c0_5 = arith.constant 0 : index
    %c0_6 = arith.constant 0 : index
    %7 = vector.load %arg4[%c0_5, %c0_6] : memref<16x128xf32, #tpu.memory_space<vmem>>, vector<16x128xf32>
    tpu.vector_store %arg4[%c0_5, %c0_6], %6 {strides = array<i32>} : memref<16x128xf32, #tpu.memory_space<vmem>>, vector<16x128xf32>,
    return
  }
  func.func @transform_0(%arg0: i32) -> (i32, i32) {
    %c0_i32 = arith.constant 0 : i32
    %c0_i32_0 = arith.constant 0 : i32
    return %arg0, %c0_i32 : i32, i32
  }
  func.func @transform_1(%arg0: i32) -> (i32, i32) {
    %c0_i32 = arith.constant 0 : i32
    %c0_i32_0 = arith.constant 0 : i32
    %c0_i32_1 = arith.constant 0 : i32
    return %c0_i32, %c0_i32_0 : i32, i32
  }
  func.func @transform_2(%arg0: i32) -> (i32, i32) {
    %c0_i32 = arith.constant 0 : i32
    %c0_i32_0 = arith.constant 0 : i32
    %c0_i32_1 = arith.constant 0 : i32
    return %c0_i32, %c0_i32_0 : i32, i32
  }
  func.func @transform_3(%arg0: i32) -> (i32, i32) {
    %c0_i32 = arith.constant 0 : i32
    %c0_i32_0 = arith.constant 0 : i32
    return %arg0, %c0_i32 : i32, i32
  }
}

</mosaic_0001>

<llo_original>
// kernel: _lambda_.1
$region0: #{_lambda_.1}
  #allocation0 [shape = 'u32[]', space=smem, size = 0x4, offset = 0x4, fixed_abs, tag = 'smem constant byte address 0x4 - core index']
  #allocation1 [shape = 'u32[144,128]{1,0:T(1,128)}', space=vmem, size = 0x12000, scoped, tag = 'internal scratch']
  %s0 = inlined_call_operand.vmem [shape: f32[16,32], index: 0, kind: input, shape index: {}]
  %s1 = inlined_call_operand.vmem [shape: bf16[32,128], index: 1, kind: input, shape index: {}]
  %s2 = inlined_call_operand.vmem [shape: f32[1,128], index: 2, kind: input, shape index: {}]
  %s3 = inlined_call_operand.vmem [shape: f32[16,128], index: 3, kind: output, shape index: {}]
  %s4 = sld [smem:[#allocation0]]
  $region22: #{_lambda_.1} parent=0
    _
  %s6 = ssub.s32 1, %s4
  %s7 = scalar_select 0, %s6, %s4
  // Predicated region
  $region2: #{_lambda_.1} parent=0 // pred_check
    _
  $region3: #{_lambda_.1} parent=0 // pred_check_branch
    %9 = sbr.rel (0) target = $region5
  $region4: #{_lambda_.1} parent=0 // pred_region
    _
  $region5: #{_lambda_.1} parent=0 // pred_fallthru
    _
  // Predicated region
  $region6: #{_lambda_.1} parent=0 // pred_check
    _
  $region7: #{_lambda_.1} parent=0 // pred_check_branch
    %11 = sbr.rel (0) target = $region9
  $region8: #{_lambda_.1} parent=0 // pred_region
    _
  $region9: #{_lambda_.1} parent=0 // pred_fallthru
    _
  // Predicated region
  $region10: #{_lambda_.1} parent=0 // pred_check
    _
  $region11: #{_lambda_.1} parent=0 // pred_check_branch
    %13 = sbr.rel (0) target = $region13
  $region12: #{_lambda_.1} parent=0 // pred_region
    _
  $region13: #{_lambda_.1} parent=0 // pred_fallthru
    _
  %v15 = vld [vmem:[%s0] sm:$0xff]
  %v16 = vld [vmem:[%s0 + $0x8] sm:$0xff]
  %v17 = vpack.c.bf16 %v16, %v15
  %v18 = vld [vmem:[%s1] sm:$0xf]
  %v19 = vld [vmem:[%s1 + $0x4] sm:$0xf]
  %v20 = vld [vmem:[%s1 + $0x8] sm:$0xf]
  %v21 = vld [vmem:[%s1 + $0xc] sm:$0xf]
  %v22 = vld [vmem:[%s2] sm:$0x1]
  %v24 = vlaneseq
  %v25 = vshrl.u32 %v24, 7
  %v26 = vsub.s32 0, %v25
  %v27 = vrot.slane %v22, %v26
  %v33 = vunpack.c.l.b16 %v18
  %v34 = vunpack.c.l.b16 %v19
  %v35 = vunpack.c.l.b16 %v20
  %v36 = vunpack.c.l.b16 %v21
  %v37 = vpack.c.b16 %v34, %v33
  %v38 = vpack.c.b16 %v36, %v35
  %vm41 = vcmask 261120
  %v43 = vsel %vm41, %v17, 0
  %45 = vmatprep.subr.bf16.mxu0 0
  %46 = vmatpush1.bf16.msra.mxu0 0
  %47 = vmatprep.subr.bf16.mxu0 0
  %48 = vmatpush1.bf16.msra.mxu0 0
  %49 = vmatprep.subr.bf16.mxu0 0
  %50 = vmatpush1.bf16.msra.mxu0 0
  %51 = vmatprep.subr.bf16.mxu0 0
  %52 = vmatpush1.bf16.msra.mxu0 0
  %53 = vmatprep.subr.bf16.mxu0 0
  %54 = vmatpush1.bf16.msra.mxu0 0
  %55 = vmatprep.subr.bf16.mxu0 0
  %56 = vmatpush1.bf16.msra.mxu0 0
  %57 = vmatprep.subr.bf16.mxu0 0
  %58 = vmatpush1.bf16.msra.mxu0 %v38
  %59 = vmatprep.subr.bf16.mxu0 0
  %60 = vmatpush1.bf16.msra.mxu0 %v37
  %61 = vmatprep.subr.bf16.mxu0 0
  %62 = vmatpush2.bf16.msra.mxu0 0
  %63 = vmatprep.subr.bf16.mxu0 0
  %64 = vmatpush2.bf16.msra.mxu0 0
  %65 = vmatprep.subr.bf16.mxu0 0
  %66 = vmatpush2.bf16.msra.mxu0 0
  %67 = vmatprep.subr.bf16.mxu0 0
  %68 = vmatpush2.bf16.msra.mxu0 0
  %69 = vmatprep.subr.bf16.mxu0 0
  %70 = vmatpush2.bf16.msra.mxu0 0
  %71 = vmatprep.subr.bf16.mxu0 0
  %72 = vmatpush2.bf16.msra.mxu0 0
  %73 = vmatprep.subr.bf16.mxu0 0
  %74 = vmatpush2.bf16.msra.mxu0 0
  %75 = vmatprep.subr.bf16.mxu0 0
  %76 = vmatpush2.bf16.msra.mxu0 0
  %77 = vmatprep.mubr.bf16.mxu0 0
  %78 = vmatmul.mubr.bf16.gmra.mxu0 %v43
  %v79 = vpop.f32.mrf.mxu0
  %v80 = vadd.f32 %v27, %v79
  %v81 = vpop.f32.mrf.mxu0
  %v82 = vpop.f32.mrf.mxu0
  %v83 = vadd.f32 %v27, %v82
  %v84 = vpop.f32.mrf.mxu0
  %85 = vdwg.mxu0
  %86 = vst [vmem:[%s3] sm:$0xff] %v80
  %87 = vst [vmem:[%s3 + $0x8] sm:$0xff] %v83
  // Predicated region
  $region14: #{_lambda_.1} parent=0 // pred_check
    _
  $region15: #{_lambda_.1} parent=0 // pred_check_branch
    %89 = sbr.rel (0) target = $region17
  $region16: #{_lambda_.1} parent=0 // pred_region
    _
  $region17: #{_lambda_.1} parent=0 // pred_fallthru
    _
  // Predicated region
  $region18: #{_lambda_.1} parent=0 // pred_check
    _
  $region19: #{_lambda_.1} parent=0 // pred_check_branch
    %91 = sbr.rel (0) target = $region21
  $region20: #{_lambda_.1} parent=0 // pred_region
    _
  $region21: #{_lambda_.1} parent=0 // pred_fallthru
    _

</llo_original>
